<compile_context>
chip_gen: v7x
topology: tpu7x:2x2x1
jax: 0.10.0
libtpu: 0.0.40
codegen_flags: <defaults>
</compile_context>

<pallas_src>
import functools

import numpy as np
import jax
import jax.numpy as jnp
from jax import lax
from jax.experimental import pallas as pl
from jax.experimental.pallas import tpu as pltpu


def _round_up(x, m):
    return (x + m - 1) // m * m


def _supcon_block_kernel(v_ref, lab_ref, out_ref, *,
                         temperature, contrast_count, block_rows, use_bf16):
    """Per row-block, per-class partial sums.

    v_ref:   (Bp, Dp)   view-0 features, zero padded, f32 (resident)
    lab_ref: (Bp, Cp)   0/1 labels, zero padded, f32 (resident)
    out_ref: (1, 8, Cp) rows = [sum_g, sum_max, sum_log, n_pos, 0, 0, 0, 0]
    """
    tb = block_rows
    cp = lab_ref.shape[1]
    start = pl.multiple_of(pl.program_id(0) * tb, tb)
    inv_t = jnp.float32(1.0 / temperature)
    cc = jnp.float32(contrast_count)
    eps = jnp.float32(1e-8)
    mm_dtype = jnp.bfloat16 if use_bf16 else jnp.float32

    vr = v_ref[pl.ds(start, tb), :]                          # (TB, Dp)
    vs = vr * inv_t                                          # fold 1/T into operand
    # Gram block on the MXU: this row block against ALL columns.
    g = lax.dot_general(vs.astype(mm_dtype), v_ref[...].astype(mm_dtype),
                        (((1,), (1,)), ((), ())),
                        preferred_element_type=jnp.float32)  # (TB, Bp)
    # Diagonal of the Gram for this row block, straight from the features
    # (no [B,B] iota / diagonal mask).
    g_diag = jnp.sum(vs * vr, axis=1, keepdims=True)         # (TB, 1)

    lab = lab_ref[...].astype(mm_dtype)                      # (Bp, Cp)
    lab_blk = lab_ref[pl.ds(start, tb), :]                   # (TB, Cp)

    # Per-class sums of raw logits: gl[a, c] = sum_{b in pos(c)} G[a, b] (MXU).
    gl = lax.dot_general(g.astype(mm_dtype), lab, (((1,), (0,)), ((), ())),
                         preferred_element_type=jnp.float32)  # (TB, Cp)

    # Single global per-row max and ONE exp pass over the [TB, Bp] block;
    # per-class exp-sums are recovered with one MXU matmul against labels.
    rmg = jnp.max(g, axis=1, keepdims=True)                  # (TB, 1)
    e = jnp.exp(g - rmg)                                     # (TB, Bp)
    s = lax.dot_general(e.astype(mm_dtype), lab, (((1,), (0,)), ((), ())),
                        preferred_element_type=jnp.float32)  # (TB, Cp)

    # Masked-exp row sum with the single diagonal entry removed, for every
    # class at once, accounting for the contrast_count-fold repetition.
    rowsum = cc * s - jnp.exp(g_diag - rmg)                  # (TB, Cp)
    # max(.,0): rowsum >= 0 analytically for positive rows; clamp guards f32
    # cancellation and rows that the lab_blk mask below zeroes out anyway.
    logterm = jnp.log(jnp.maximum(rowsum, 0.0) + eps)        # (TB, Cp)

    sum_g = jnp.sum(lab_blk * gl, axis=0, keepdims=True)     # (1, Cp)
    sum_mx = jnp.sum(lab_blk * rmg, axis=0, keepdims=True)   # (1, Cp)
    sum_lg = jnp.sum(lab_blk * logterm, axis=0, keepdims=True)  # (1, Cp)
    n_pos = jnp.sum(lab_blk, axis=0, keepdims=True)          # (1, Cp)

    out_ref[0] = jnp.concatenate(
        [sum_g, sum_mx, sum_lg, n_pos, jnp.zeros((4, cp), jnp.float32)], axis=0)


def _supcon_finalize_kernel(part_ref, out_ref):
    """Reduce per-block partials -> scalar loss (mean over valid classes)."""
    p = part_ref[...]                     # (n_blk, 8, Cp)
    tot = jnp.sum(p, axis=0)              # (8, Cp)
    sum_g = tot[0:1, :]
    sum_mx = tot[1:2, :]
    sum_lg = tot[2:3, :]
    n_pos = tot[3:4, :]
    safe = jnp.maximum(n_pos, 1.0)
    # mean over all (n_pos*cc)^2 log-prob entries, written in terms of the
    # un-repeated positive-submatrix sums (exact algebraic identity).
    mean_log_prob = sum_g / (safe * safe) - (sum_mx + sum_lg) / safe
    valid = (n_pos >= 2.0).astype(jnp.float32)   # padded classes have n_pos==0
    total = jnp.sum(-mean_log_prob * valid)
    count = jnp.sum(valid)
    out_ref[0] = jnp.where(count > 0.0, total / jnp.maximum(count, 1.0),
                           jnp.float32(0.0))


def class_wise_supcon_loss(features, labels, temperature=0.07, block_rows=256,
                           use_bf16_matmul=False):
    """JAX/Pallas equivalent of ClassWiseSupConLoss.forward."""
    if features.ndim < 3:
        raise ValueError("`features` needs to be [batch_size, n_views, feature_dim].")
    if features.ndim > 3:
        features = features.reshape(features.shape[0], features.shape[1], -1)
    batch, n_views, feat_dim = features.shape
    num_classes = labels.shape[1]

    # Only view-0 features are ever selected by the reference indexing.
    v = features[:, 0, :].astype(jnp.float32)
    # Binarize so multiplicative masking == the reference's `labels[:, c] == 1`.
    lab = (labels == 1).astype(jnp.float32)

    # TPU-friendly padding: lanes to multiples of 128, sublanes to 8.
    dp = _round_up(feat_dim, 128)
    cp = _round_up(num_classes, 128)

    # Row-block size: multiple of 8 (128 when large), and small enough that a
    # single-block batch is still split in two (keeps both v7x cores busy).
    br = max(8, (int(block_rows) // 8) * 8)
    half = (batch + 1) // 2
    tb_cand = _round_up(half, 128) if half >= 128 else _round_up(half, 8)
    tb = max(8, min(br, tb_cand))
    bp = _round_up(batch, tb)
    n_blk = bp // tb

    v_p = jnp.zeros((bp, dp), jnp.float32).at[:batch, :feat_dim].set(v)
    lab_p = jnp.zeros((bp, cp), jnp.float32).at[:batch, :num_classes].set(lab)

    # Footprint-derived scoped-VMEM limit (resident inputs with double-buffer
    # allowance + (TB,Bp) Gram/exp intermediates + per-class panels + output).
    f32 = 4
    est = (2 * (bp * dp + bp * cp) * f32                 # resident inputs
           + 2 * n_blk * 8 * cp * f32                    # partial outputs
           + (2 * bp + 2 * dp + 6 * cp + 32) * tb * f32)  # in-kernel temporaries
    vmem_limit = int(min(max(est + (8 << 20), 16 << 20), 112 << 20))
    # TODO(synk): for very large batch (resident operands approaching v7x's
    # 64 MiB/TC) stream (tk, Dp)/(tk, Cp) column panels with
    # pltpu.emit_pipeline instead of keeping all Bp rows resident.

    blk_kernel = functools.partial(
        _supcon_block_kernel,
        temperature=float(temperature),
        contrast_count=int(n_views),
        block_rows=int(tb),
        use_bf16=bool(use_bf16_matmul),
    )

    partials = pl.pallas_call(
        blk_kernel,
        grid=(n_blk,),
        in_specs=[
            pl.BlockSpec((bp, dp), lambda i: (0, 0)),   # features, resident
            pl.BlockSpec((bp, cp), lambda i: (0, 0)),   # labels, resident
        ],
        out_specs=pl.BlockSpec((1, 8, cp), lambda i: (i, 0, 0)),
        out_shape=jax.ShapeDtypeStruct((n_blk, 8, cp), jnp.float32),
        compiler_params=pltpu.CompilerParams(
            dimension_semantics=("parallel",),      # each block writes its own
            vmem_limit_bytes=vmem_limit,            # partials -> megacore-safe
        ),
    )(v_p, lab_p)

    out = pl.pallas_call(
        _supcon_finalize_kernel,
        out_shape=jax.ShapeDtypeStruct((1,), jnp.float32),
        in_specs=[pl.BlockSpec(memory_space=pltpu.MemorySpace.VMEM)],
        out_specs=pl.BlockSpec(memory_space=pltpu.MemorySpace.SMEM),
    )(partials)
    return out[0]


def _numpy_reference(features, labels, temperature):
    """Line-by-line NumPy port of the PyTorch forward (for verification)."""
    features = np.asarray(features, np.float32)
    labels = np.asarray(labels)
    if features.ndim > 3:
        features = features.reshape(features.shape[0], features.shape[1], -1)
    n_views = features.shape[1]
    contrast_feature = np.concatenate(
        [features[:, v, :] for v in range(n_views)], axis=0)
    losses = []
    for c in range(labels.shape[1]):
        pos = np.where(labels[:, c] == 1)[0]
        if len(pos) < 2:
            continue
        idx = np.repeat(pos, n_views)
        cf = contrast_feature[idx]
        sim = cf @ cf.T / temperature
        logits = sim - sim.max(axis=1, keepdims=True)
        logits_mask = np.ones_like(logits)
        np.fill_diagonal(logits_mask, 0.0)
        exp_logits = np.exp(logits) * logits_mask
        log_prob = logits - np.log(exp_logits.sum(axis=1, keepdims=True) + 1e-08)
        losses.append(-log_prob.mean())
    return float(np.mean(losses)) if losses else 0.0


if __name__ == "__main__":
    key = jax.random.PRNGKey(0)
    k1, k2, k3, k4 = jax.random.split(key, 4)

    # Test 1: aligned-ish small case.
    B, V, D, C = 8, 2, 32, 4
    feats = jax.random.normal(k1, (B, V, D), dtype=jnp.float32)
    feats = feats / jnp.linalg.norm(feats, axis=-1, keepdims=True)
    labels = jax.random.bernoulli(k2, 0.5, (B, C)).astype(jnp.int32)
    loss = jax.block_until_ready(class_wise_supcon_loss(feats, labels, 0.07))
    ref = _numpy_reference(np.asarray(feats), np.asarray(labels), 0.07)
    assert np.allclose(float(loss), ref, rtol=1e-3, atol=1e-3), (float(loss), ref)

    # Test 2: unaligned shapes (exercise padding + 2 row blocks) and a class
    # with < 2 positives (must be skipped).
    B2, V2, D2, C2 = 12, 3, 20, 3
    feats2 = jax.random.normal(k3, (B2, V2, D2), dtype=jnp.float32)
    feats2 = feats2 / jnp.linalg.norm(feats2, axis=-1, keepdims=True)
    labels2 = jax.random.bernoulli(k4, 0.6, (B2, C2)).astype(jnp.int32)
    labels2 = labels2.at[:, 2].set(0)
    labels2 = labels2.at[0, 2].set(1)   # class 2 has exactly one positive -> skipped
    loss2 = jax.block_until_ready(class_wise_supcon_loss(feats2, labels2, 0.1))
    ref2 = _numpy_reference(np.asarray(feats2), np.asarray(labels2), 0.1)
    assert np.allclose(float(loss2), ref2, rtol=1e-3, atol=1e-3), (float(loss2), ref2)

    print("KERNEL_OK")
</pallas_src>

<mosaic_0001>
module attributes {stable_mosaic.version = 11 : i64} {
  func.func @_supcon_block_kernel(%arg0: i32, %arg1: memref<8x128xf32, #tpu.memory_space<vmem>>, %arg2: memref<8x128xf32, #tpu.memory_space<vmem>>, %arg3: memref<1x8x128xf32, #tpu.memory_space<vmem>>) attributes {dimension_semantics = [#tpu.dimension_semantics<parallel>], iteration_bounds = array<i64: 1>, scalar_prefetch = 0 : i64, scratch_operands = 0 : i64, tpu.core_type = #tpu.core_type<tc>, window_params = [{pipeline_mode = #tpu.pipeline_mode<synchronous>, transform_indices = @transform_0, window_bounds = array<i64: 8, 128>}, {pipeline_mode = #tpu.pipeline_mode<synchronous>, transform_indices = @transform_1, window_bounds = array<i64: 8, 128>}, {transform_indices = @transform_2, window_bounds = array<i64: 1, 8, 128>}]} {
    %c8_i32 = arith.constant 8 : i32
    %0 = arith.muli %arg0, %c8_i32 : i32
    %1 = tpu.assume_multiple %0, 8 : i32
    %2 = arith.index_cast %1 : i32 to index
    %c0 = arith.constant 0 : index
    %3 = vector.load %arg1[%2, %c0] : memref<8x128xf32, #tpu.memory_space<vmem>>, vector<8x128xf32>
    %cst = arith.constant 14.2857141 : f32
    %4 = vector.broadcast %cst : f32 to vector<8x128xf32>
    %5 = arith.mulf %3, %4 : vector<8x128xf32>
    %c0_0 = arith.constant 0 : index
    %c0_1 = arith.constant 0 : index
    %6 = vector.load %arg1[%c0_0, %c0_1] : memref<8x128xf32, #tpu.memory_space<vmem>>, vector<8x128xf32>
    %cst_2 = arith.constant dense<0.000000e+00> : vector<8x8xf32>
    %7 = tpu.matmul %5, %6, %cst_2 {dimension_numbers = #tpu.dot_dimension_numbers<[1], [1], [0], [0], [0, 0, 1, 0], [], []>} : vector<8x128xf32>, vector<8x128xf32>, vector<8x8xf32> -> vector<8x8xf32>
    %8 = arith.mulf %5, %3 : vector<8x128xf32>
    %cst_3 = arith.constant dense<0.000000e+00> : vector<8xf32>
    %9 = vector.multi_reduction <add>, %8, %cst_3 [1] : vector<8x128xf32> to vector<8xf32>
    %10 = vector.shape_cast %9 : vector<8xf32> to vector<8x1xf32>
    %c0_4 = arith.constant 0 : index
    %c0_5 = arith.constant 0 : index
    %11 = vector.load %arg2[%c0_4, %c0_5] : memref<8x128xf32, #tpu.memory_space<vmem>>, vector<8x128xf32>
    %12 = arith.index_cast %1 : i32 to index
    %c0_6 = arith.constant 0 : index
    %13 = vector.load %arg2[%12, %c0_6] : memref<8x128xf32, #tpu.memory_space<vmem>>, vector<8x128xf32>
    %cst_7 = arith.constant dense<0.000000e+00> : vector<8x128xf32>
    %14 = tpu.matmul %7, %11, %cst_7 {dimension_numbers = #tpu.dot_dimension_numbers<[1], [0], [0], [1], [0, 0, 1, 1], [], []>} : vector<8x8xf32>, vector<8x128xf32>, vector<8x128xf32> -> vector<8x128xf32>
    %cst_8 = arith.constant dense<0xFF800000> : vector<8xf32>
    %15 = vector.multi_reduction <maximumf>, %7, %cst_8 [1] : vector<8x8xf32> to vector<8xf32>
    %16 = vector.shape_cast %15 : vector<8xf32> to vector<8x1xf32>
    %17 = vector.broadcast %16 : vector<8x1xf32> to vector<8x8xf32>
    %18 = arith.subf %7, %17 : vector<8x8xf32>
    %19 = math.exp %18 : vector<8x8xf32>
    %cst_9 = arith.constant dense<0.000000e+00> : vector<8x128xf32>
    %20 = tpu.matmul %19, %11, %cst_9 {dimension_numbers = #tpu.dot_dimension_numbers<[1], [0], [0], [1], [0, 0, 1, 1], [], []>} : vector<8x8xf32>, vector<8x128xf32>, vector<8x128xf32> -> vector<8x128xf32>
    %cst_10 = arith.constant 2.000000e+00 : f32
    %21 = vector.broadcast %cst_10 : f32 to vector<8x128xf32>
    %22 = arith.mulf %21, %20 : vector<8x128xf32>
    %23 = arith.subf %10, %16 : vector<8x1xf32>
    %24 = math.exp %23 : vector<8x1xf32>
    %25 = vector.broadcast %24 : vector<8x1xf32> to vector<8x128xf32>
    %26 = arith.subf %22, %25 : vector<8x128xf32>
    %cst_11 = arith.constant 0.000000e+00 : f32
    %27 = vector.broadcast %cst_11 : f32 to vector<8x128xf32>
    %28 = arith.maximumf %26, %27 : vector<8x128xf32>
    %cst_12 = arith.constant 9.99999993E-9 : f32
    %29 = vector.broadcast %cst_12 : f32 to vector<8x128xf32>
    %30 = arith.addf %28, %29 : vector<8x128xf32>
    %31 = math.log %30 : vector<8x128xf32>
    %32 = arith.mulf %13, %14 : vector<8x128xf32>
    %cst_13 = arith.constant dense<0.000000e+00> : vector<128xf32>
    %33 = vector.multi_reduction <add>, %32, %cst_13 [0] : vector<8x128xf32> to vector<128xf32>
    %34 = vector.shape_cast %33 : vector<128xf32> to vector<1x128xf32>
    %35 = vector.broadcast %16 : vector<8x1xf32> to vector<8x128xf32>
    %36 = arith.mulf %13, %35 : vector<8x128xf32>
    %cst_14 = arith.constant dense<0.000000e+00> : vector<128xf32>
    %37 = vector.multi_reduction <add>, %36, %cst_14 [0] : vector<8x128xf32> to vector<128xf32>
    %38 = vector.shape_cast %37 : vector<128xf32> to vector<1x128xf32>
    %39 = arith.mulf %13, %31 : vector<8x128xf32>
    %cst_15 = arith.constant dense<0.000000e+00> : vector<128xf32>
    %40 = vector.multi_reduction <add>, %39, %cst_15 [0] : vector<8x128xf32> to vector<128xf32>
    %41 = vector.shape_cast %40 : vector<128xf32> to vector<1x128xf32>
    %cst_16 = arith.constant dense<0.000000e+00> : vector<128xf32>
    %42 = vector.multi_reduction <add>, %13, %cst_16 [0] : vector<8x128xf32> to vector<128xf32>
    %43 = vector.shape_cast %42 : vector<128xf32> to vector<1x128xf32>
    %cst_17 = arith.constant 0.000000e+00 : f32
    %44 = vector.broadcast %cst_17 : f32 to vector<4x128xf32>
    %45 = tpu.concatenate %34, %38, %41, %43, %44 in 0 : vector<1x128xf32>, vector<1x128xf32>, vector<1x128xf32>, vector<1x128xf32>, vector<4x128xf32> -> vector<8x128xf32>
    %c0_18 = arith.constant 0 : index
    %c0_19 = arith.constant 0 : index
    %c0_20 = arith.constant 0 : index
    %46 = vector.load %arg3[%c0_18, %c0_19, %c0_20] : memref<1x8x128xf32, #tpu.memory_space<vmem>>, vector<1x8x128xf32>
    %47 = vector.shape_cast %46 : vector<1x8x128xf32> to vector<8x128xf32>
    %48 = vector.shape_cast %45 : vector<8x128xf32> to vector<1x8x128xf32>
    tpu.vector_store %arg3[%c0_18, %c0_19, %c0_20], %48 {strides = array<i32>} : memref<1x8x128xf32, #tpu.memory_space<vmem>>, vector<1x8x128xf32>,
    return
  }
  func.func @transform_0(%arg0: i32) -> (i32, i32) {
    %c0_i32 = arith.constant 0 : i32
    %c0_i32_0 = arith.constant 0 : i32
    %c0_i32_1 = arith.constant 0 : i32
    return %c0_i32, %c0_i32_0 : i32, i32
  }
  func.func @transform_1(%arg0: i32) -> (i32, i32) {
    %c0_i32 = arith.constant 0 : i32
    %c0_i32_0 = arith.constant 0 : i32
    %c0_i32_1 = arith.constant 0 : i32
    return %c0_i32, %c0_i32_0 : i32, i32
  }
  func.func @transform_2(%arg0: i32) -> (i32, i32, i32) {
    %c0_i32 = arith.constant 0 : i32
    %c0_i32_0 = arith.constant 0 : i32
    %c0_i32_1 = arith.constant 0 : i32
    return %arg0, %c0_i32, %c0_i32_0 : i32, i32, i32
  }
}

</mosaic_0001>

<llo_original>
// kernel: tpu_custom_call.1
$region0: #{tpu_custom_call.1}
  #allocation0 [shape = 'u32[]', space=smem, size = 0x4, offset = 0x4, fixed_abs, tag = 'smem constant byte address 0x4 - core index']
  #allocation1 [shape = 'u32[144,128]{1,0:T(1,128)}', space=vmem, size = 0x12000, scoped, tag = 'internal scratch']
  %s0 = inlined_call_operand.hbm [shape: f32[8,128], index: 0, kind: input, shape index: {}]
  %s1 = inlined_call_operand.hbm [shape: f32[8,128], index: 1, kind: input, shape index: {}]
  %s2 = inlined_call_operand.hbm [shape: f32[1,8,128], index: 2, kind: output, shape index: {}]
  %s3 = sld [smem:[#allocation0]]
  $region26: #{tpu_custom_call.1} parent=0
    _
  %s5 = ssub.s32 1, %s3
  %s6 = scalar_select 0, %s5, %s3
  $region1: #{tpu_custom_call.1} parent=0
    #allocation2 [shape = 'u8[4096]{0}', space=vmem, size = 0x1000, scoped, tag = 'input window, operand 0, single buffered']
    #allocation3 [shape = 's32[1]{0}', space=sflag, size = 0x4, scoped, tag = 'scoped memory for tpu_custom_call.1']
    #allocation4 [shape = 's32[1]{0}', space=sflag, size = 0x4, scoped, tag = 'scoped memory for tpu_custom_call.1']
    #allocation5 [shape = 'u8[4096]{0}', space=vmem, size = 0x1000, scoped, tag = 'input window, operand 1, single buffered']
    #allocation6 [shape = 's32[1]{0}', space=sflag, size = 0x4, scoped, tag = 'scoped memory for tpu_custom_call.1']
    #allocation7 [shape = 'u8[4096]{0}', space=vmem, size = 0x1000, scoped, tag = 'output window, operand 0, single buffered']
    %7 = vsyncpa [#allocation3], 0
    %8 = vsyncpa [#allocation6], 0
    %9 = vsyncpa [#allocation4], 0
    // Predicated region
    $region2: #{tpu_custom_call.1} parent=1 // pred_check
      _
    $region3: #{tpu_custom_call.1} parent=1 // pred_check_branch
      %11 = sbr.rel (0) target = $region5
    $region4: #{tpu_custom_call.1} parent=1 // pred_region
      %s13 = ssub.s32 128, 128
      %14 = vsyncadd [#allocation3], %s13
      %s16 = sshll.u32 [#allocation2], 4
      %s17 = int_to_ptr.vmem [resolvable:$true] %s16
      %19 = dma.hbm_to_vmem [thread:$0]  %s0, 128, %s17, [#allocation3]
    $region5: #{tpu_custom_call.1} parent=1 // pred_fallthru
      _
    // Predicated region
    $region6: #{tpu_custom_call.1} parent=1 // pred_check
      _
    $region7: #{tpu_custom_call.1} parent=1 // pred_check_branch
      %21 = sbr.rel (0) target = $region9
    $region8: #{tpu_custom_call.1} parent=1 // pred_region
      %s23 = ssub.s32 128, 128
      %24 = vsyncadd [#allocation6], %s23
      %s26 = sshll.u32 [#allocation5], 4
      %s27 = int_to_ptr.vmem [resolvable:$true] %s26
      %29 = dma.hbm_to_vmem [thread:$0]  %s1, 128, %s27, [#allocation6]
    $region9: #{tpu_custom_call.1} parent=1 // pred_fallthru
      _
    // Predicated region
    $region10: #{tpu_custom_call.1} parent=1 // pred_check
      _
    $region11: #{tpu_custom_call.1} parent=1 // pred_check_branch
      %31 = sbr.rel (0) target = $region13
    $region12: #{tpu_custom_call.1} parent=1 // pred_region
      %32 = dma.done [#allocation3], 128
    $region13: #{tpu_custom_call.1} parent=1 // pred_fallthru
      _
    // Predicated region
    $region14: #{tpu_custom_call.1} parent=1 // pred_check
      _
    $region15: #{tpu_custom_call.1} parent=1 // pred_check_branch
      %34 = sbr.rel (0) target = $region17
    $region16: #{tpu_custom_call.1} parent=1 // pred_region
      %35 = dma.done [#allocation6], 128
    $region17: #{tpu_custom_call.1} parent=1 // pred_fallthru
      _
    %s36 = smul.u32 0, 8
    %s37 = scalar_lea.vmem [#allocation2], %s36
    %v38 = vld [vmem:[%s37] sm:$0xff]
    %v39 = vmul.f32 %v38, 14.285714
    %v40 = vld [vmem:[#allocation2] sm:$0xff]
    %41 = vmatprep.subr.mxu0 0.0
    %42 = vmatpush1.xpose.msra.mxu0 %v40
    %43 = vmatprep.subr.mxu0 0.0
    %44 = vmatpush1.xpose.msra.mxu0 0.0
    %45 = vmatprep.subr.mxu0 0.0
    %46 = vmatpush1.xpose.msra.mxu0 0.0
    %47 = vmatprep.subr.mxu0 0.0
    %48 = vmatpush1.xpose.msra.mxu0 0.0
    %49 = vmatprep.subr.mxu0 0.0
    %50 = vmatpush1.xpose.msra.mxu0 0.0
    %51 = vmatprep.subr.mxu0 0.0
    %52 = vmatpush1.xpose.msra.mxu0 0.0
    %53 = vmatprep.subr.mxu0 0.0
    %54 = vmatpush1.xpose.msra.mxu0 0.0
    %55 = vmatprep.subr.mxu0 0.0
    %56 = vmatpush1.xpose.msra.mxu0 0.0
    %57 = vmatprep.subr.mxu0 0.0
    %58 = vmatpush1.xpose.msra.mxu0 0.0
    %59 = vmatprep.subr.mxu0 0.0
    %60 = vmatpush1.xpose.msra.mxu0 0.0
    %61 = vmatprep.subr.mxu0 0.0
    %62 = vmatpush1.xpose.msra.mxu0 0.0
    %63 = vmatprep.subr.mxu0 0.0
    %64 = vmatpush1.xpose.msra.mxu0 0.0
    %65 = vmatprep.subr.mxu0 0.0
    %66 = vmatpush1.xpose.msra.mxu0 0.0
    %67 = vmatprep.subr.mxu0 0.0
    %68 = vmatpush1.xpose.msra.mxu0 0.0
    %69 = vmatprep.subr.mxu0 0.0
    %70 = vmatpush1.xpose.msra.mxu0 0.0
    %71 = vmatprep.subr.mxu0 0.0
    %72 = vmatpush1.xpose.msra.mxu0 0.0
    %73 = vmatprep.subr.mxu0 0.0
    %74 = vmatpush1.xpose.msra.mxu0 0.0
    %75 = vmatprep.subr.mxu0 0.0
    %76 = vmatpush1.xpose.msra.mxu0 0.0
    %77 = vmatprep.subr.mxu0 0.0
    %78 = vmatpush1.xpose.msra.mxu0 0.0
    %79 = vmatprep.subr.mxu0 0.0
    %80 = vmatpush1.xpose.msra.mxu0 0.0
    %81 = vmatprep.subr.mxu0 0.0
    %82 = vmatpush1.xpose.msra.mxu0 0.0
    %83 = vmatprep.subr.mxu0 0.0
    %84 = vmatpush1.xpose.msra.mxu0 0.0
    %85 = vmatprep.subr.mxu0 0.0
    %86 = vmatpush1.xpose.msra.mxu0 0.0
    %87 = vmatprep.subr.mxu0 0.0
    %88 = vmatpush1.xpose.msra.mxu0 0.0
    %89 = vmatprep.subr.mxu0 0.0
    %90 = vmatpush1.xpose.msra.mxu0 0.0
    %91 = vmatprep.subr.mxu0 0.0
    %92 = vmatpush1.xpose.msra.mxu0 0.0
    %93 = vmatprep.subr.mxu0 0.0
    %94 = vmatpush1.xpose.msra.mxu0 0.0
    %95 = vmatprep.subr.mxu0 0.0
    %96 = vmatpush1.xpose.msra.mxu0 0.0
    %97 = vmatprep.subr.mxu0 0.0
    %98 = vmatpush1.xpose.msra.mxu0 0.0
    %99 = vmatprep.subr.mxu0 0.0
    %100 = vmatpush1.xpose.msra.mxu0 0.0
    %101 = vmatprep.subr.mxu0 0.0
    %102 = vmatpush1.xpose.msra.mxu0 0.0
    %103 = vmatprep.subr.mxu0 0.0
    %104 = vmatpush1.xpose.msra.mxu0 0.0
    %105 = vmatprep.mubr.f32.mxu0 0.0
    %106 = vmatmul.mubr.f32.gmra.mrb[0].mxu0 %v39
    %v107 = vpop.f32.mrb[0].mxu0
    %v108 = vadd.f32 0.0, %v107
    %v109 = vpop.f32.mrb[0].mxu0
    %110 = vdwg.mxu0
    %v111 = vmul.f32 %v39, %v38
    %112 = vadd.xlane.f32.xlu0 %v111
    %v113 = vpop.xlane.xlu0 %112
    %v114 = vld [vmem:[#allocation5] sm:$0xff]
    %s115 = scalar_lea.vmem [#allocation5], %s36
    %v116 = vld [vmem:[%s115] sm:$0xff]
    %vm117 = vcmask 64512
    %v119 = vsel %vm117, %v108, 0
    %121 = vmatprep.subr.mxu0 0.0
    %122 = vmatpush1.msra.mxu0 %v114
    %123 = vmatprep.subr.mxu0 0.0
    %124 = vmatpush1.msra.mxu0 0.0
    %125 = vmatprep.subr.mxu0 0.0
    %126 = vmatpush1.msra.mxu0 0.0
    %127 = vmatprep.subr.mxu0 0.0
    %128 = vmatpush1.msra.mxu0 0.0
    %129 = vmatprep.subr.mxu0 0.0
    %130 = vmatpush1.msra.mxu0 0.0
    %131 = vmatprep.subr.mxu0 0.0
    %132 = vmatpush1.msra.mxu0 0.0
    %133 = vmatprep.subr.mxu0 0.0
    %134 = vmatpush1.msra.mxu0 0.0
    %135 = vmatprep.subr.mxu0 0.0
    %136 = vmatpush1.msra.mxu0 0.0
    %137 = vmatprep.subr.mxu0 0.0
    %138 = vmatpush1.msra.mxu0 0.0
    %139 = vmatprep.subr.mxu0 0.0
    %140 = vmatpush1.msra.mxu0 0.0
    %141 = vmatprep.subr.mxu0 0.0
    %142 = vmatpush1.msra.mxu0 0.0
    %143 = vmatprep.subr.mxu0 0.0
    %144 = vmatpush1.msra.mxu0 0.0
    %145 = vmatprep.subr.mxu0 0.0
    %146 = vmatpush1.msra.mxu0 0.0
    %147 = vmatprep.subr.mxu0 0.0
    %148 = vmatpush1.msra.mxu0 0.0
    %149 = vmatprep.subr.mxu0 0.0
    %150 = vmatpush1.msra.mxu0 0.0
    %151 = vmatprep.subr.mxu0 0.0
    %152 = vmatpush1.msra.mxu0 0.0
    %153 = vmatprep.subr.mxu0 0.0
    %154 = vmatpush1.msra.mxu0 0.0
    %155 = vmatprep.subr.mxu0 0.0
    %156 = vmatpush1.msra.mxu0 0.0
    %157 = vmatprep.subr.mxu0 0.0
    %158 = vmatpush1.msra.mxu0 0.0
    %159 = vmatprep.subr.mxu0 0.0
    %160 = vmatpush1.msra.mxu0 0.0
    %161 = vmatprep.subr.mxu0 0.0
    %162 = vmatpush1.msra.mxu0 0.0
    %163 = vmatprep.subr.mxu0 0.0
    %164 = vmatpush1.msra.mxu0 0.0
    %165 = vmatprep.subr.mxu0 0.0
    %166 = vmatpush1.msra.mxu0 0.0
    %167 = vmatprep.subr.mxu0 0.0
    %168 = vmatpush1.msra.mxu0 0.0
    %169 = vmatprep.subr.mxu0 0.0
    %170 = vmatpush1.msra.mxu0 0.0
    %171 = vmatprep.subr.mxu0 0.0
    %172 = vmatpush1.msra.mxu0 0.0
    %173 = vmatprep.subr.mxu0 0.0
    %174 = vmatpush1.msra.mxu0 0.0
    %175 = vmatprep.subr.mxu0 0.0
    %176 = vmatpush1.msra.mxu0 0.0
    %177 = vmatprep.subr.mxu0 0.0
    %178 = vmatpush1.msra.mxu0 0.0
    %179 = vmatprep.subr.mxu0 0.0
    %180 = vmatpush1.msra.mxu0 0.0
    %181 = vmatprep.subr.mxu0 0.0
    %182 = vmatpush1.msra.mxu0 0.0
    %183 = vmatprep.subr.mxu0 0.0
    %184 = vmatpush1.msra.mxu0 0.0
    %185 = vmatprep.mubr.f32.mxu0 0.0
    %186 = vmatmul.mubr.f32.gmra.mrb[0].mxu0 %v119
    %v187 = vpop.f32.mrb[0].mxu0
    %v188 = vadd.f32 0.0, %v187
    %v189 = vpop.f32.mrb[0].mxu0
    %190 = vdwg.mxu0
    %v191 = vsel %vm117, %v108, -inf
    %192 = vmax.xlane.f32.xlu0 %v191
    %v193 = vpop.xlane.xlu0 %192
    %v194 = vsub.f32 %v108, %v193
    %v195 = vmul.f32 %v194, 1.442695
    %v196 = vpow.pop %v195
    %v198 = vsel %vm117, %v196, 0
    %200 = vmatprep.subr.mxu0 0.0
    %201 = vmatpush1.msra.mxu0 %v114
    %202 = vmatprep.subr.mxu0 0.0
    %203 = vmatpush1.msra.mxu0 0.0
    %204 = vmatprep.subr.mxu0 0.0
    %205 = vmatpush1.msra.mxu0 0.0
    %206 = vmatprep.subr.mxu0 0.0
    %207 = vmatpush1.msra.mxu0 0.0
    %208 = vmatprep.subr.mxu0 0.0
    %209 = vmatpush1.msra.mxu0 0.0
    %210 = vmatprep.subr.mxu0 0.0
    %211 = vmatpush1.msra.mxu0 0.0
    %212 = vmatprep.subr.mxu0 0.0
    %213 = vmatpush1.msra.mxu0 0.0
    %214 = vmatprep.subr.mxu0 0.0
    %215 = vmatpush1.msra.mxu0 0.0
    %216 = vmatprep.subr.mxu0 0.0
    %217 = vmatpush1.msra.mxu0 0.0
    %218 = vmatprep.subr.mxu0 0.0
    %219 = vmatpush1.msra.mxu0 0.0
    %220 = vmatprep.subr.mxu0 0.0
    %221 = vmatpush1.msra.mxu0 0.0
    %222 = vmatprep.subr.mxu0 0.0
    %223 = vmatpush1.msra.mxu0 0.0
    %224 = vmatprep.subr.mxu0 0.0
    %225 = vmatpush1.msra.mxu0 0.0
    %226 = vmatprep.subr.mxu0 0.0
    %227 = vmatpush1.msra.mxu0 0.0
    %228 = vmatprep.subr.mxu0 0.0
    %229 = vmatpush1.msra.mxu0 0.0
    %230 = vmatprep.subr.mxu0 0.0
    %231 = vmatpush1.msra.mxu0 0.0
    %232 = vmatprep.subr.mxu0 0.0
    %233 = vmatpush1.msra.mxu0 0.0
    %234 = vmatprep.subr.mxu0 0.0
    %235 = vmatpush1.msra.mxu0 0.0
    %236 = vmatprep.subr.mxu0 0.0
    %237 = vmatpush1.msra.mxu0 0.0
    %238 = vmatprep.subr.mxu0 0.0
    %239 = vmatpush1.msra.mxu0 0.0
    %240 = vmatprep.subr.mxu0 0.0
    %241 = vmatpush1.msra.mxu0 0.0
    %242 = vmatprep.subr.mxu0 0.0
    %243 = vmatpush1.msra.mxu0 0.0
    %244 = vmatprep.subr.mxu0 0.0
    %245 = vmatpush1.msra.mxu0 0.0
    %246 = vmatprep.subr.mxu0 0.0
    %247 = vmatpush1.msra.mxu0 0.0
    %248 = vmatprep.subr.mxu0 0.0
    %249 = vmatpush1.msra.mxu0 0.0
    %250 = vmatprep.subr.mxu0 0.0
    %251 = vmatpush1.msra.mxu0 0.0
    %252 = vmatprep.subr.mxu0 0.0
    %253 = vmatpush1.msra.mxu0 0.0
    %254 = vmatprep.subr.mxu0 0.0
    %255 = vmatpush1.msra.mxu0 0.0
    %256 = vmatprep.subr.mxu0 0.0
    %257 = vmatpush1.msra.mxu0 0.0
    %258 = vmatprep.subr.mxu0 0.0
    %259 = vmatpush1.msra.mxu0 0.0
    %260 = vmatprep.subr.mxu0 0.0
    %261 = vmatpush1.msra.mxu0 0.0
    %262 = vmatprep.subr.mxu0 0.0
    %263 = vmatpush1.msra.mxu0 0.0
    %264 = vmatprep.mubr.f32.mxu0 0.0
    %265 = vmatmul.mubr.f32.gmra.mrb[0].mxu0 %v198
    %v266 = vpop.f32.mrb[0].mxu0
    %v267 = vadd.f32 0.0, %v266
    %v268 = vpop.f32.mrb[0].mxu0
    %269 = vdwg.mxu0
    %v270 = vmul.f32 %v267, 2.0
    %v271 = vsub.f32 %v113, %v193
    %v272 = vmul.f32 %v271, 1.442695
    %v273 = vpow.pop %v272
    %v274 = vsub.f32 %v270, %v273
    %v275 = vmax.f32 %v274, 0.0
    %v276 = vadd.f32 %v275, 1e-08
    %v277 = vlog2.pop %v276
    %v278 = vmul.f32 %v277, 0.6931472
    %v279 = vmul.f32 %v116, %v188
    %v280 = vrot.slane %v279, 4
    %v281 = vadd.f32 %v279, %v280
    %v282 = vrot.slane %v281, 2
    %v283 = vadd.f32 %v281, %v282
    %v284 = vrot.slane %v283, 1
    %v285 = vadd.f32 %v283, %v284
    %v286 = vmul.f32 %v116, %v193
    %v287 = vrot.slane %v286, 4
    %v288 = vadd.f32 %v286, %v287
    %v289 = vrot.slane %v288, 2
    %v290 = vadd.f32 %v288, %v289
    %v291 = vrot.slane %v290, 1
    %v292 = vadd.f32 %v290, %v291
    %v293 = vmul.f32 %v116, %v278
    %v294 = vrot.slane %v293, 4
    %v295 = vadd.f32 %v293, %v294
    %v296 = vrot.slane %v295, 2
    %v297 = vadd.f32 %v295, %v296
    %v298 = vrot.slane %v297, 1
    %v299 = vadd.f32 %v297, %v298
    %v300 = vrot.slane %v116, 4
    %v301 = vadd.f32 %v116, %v300
    %v302 = vrot.slane %v301, 2
    %v303 = vadd.f32 %v301, %v302
    %v304 = vrot.slane %v303, 1
    %v305 = vadd.f32 %v303, %v304
    %vm306 = vcmask 1040384
    %v307 = vsel %vm306, %v285, %v292
    %vm308 = vcmask 1041408
    %v309 = vsel %vm308, %v307, %v299
    %vm310 = vcmask 1042432
    %v311 = vsel %vm310, %v309, %v305
    %vm312 = vcmask 1043456
    %v313 = vsel %vm312, %v311, 0.0
    %314 = vst [vmem:[#allocation7] sm:$0xff] %v313
    // Predicated region
    $region18: #{tpu_custom_call.1} parent=1 // pred_check
      _
    $region19: #{tpu_custom_call.1} parent=1 // pred_check_branch
      %316 = sbr.rel (0) target = $region21
    $region20: #{tpu_custom_call.1} parent=1 // pred_region
      %s318 = ssub.s32 128, 128
      %319 = vsyncadd [#allocation4], %s318
      %s321 = sshll.u32 [#allocation7], 4
      %s322 = int_to_ptr.vmem [resolvable:$true] %s321
      %324 = dma.vmem_to_hbm [thread:$0]  %s322, 128, %s2, [#allocation4]
    $region21: #{tpu_custom_call.1} parent=1 // pred_fallthru
      _
    // Predicated region
    $region22: #{tpu_custom_call.1} parent=1 // pred_check
      _
    $region23: #{tpu_custom_call.1} parent=1 // pred_check_branch
      %326 = sbr.rel (0) target = $region25
    $region24: #{tpu_custom_call.1} parent=1 // pred_region
      %327 = dma.done [#allocation4], 128
    $region25: #{tpu_custom_call.1} parent=1 // pred_fallthru
      _
    %328 = vsyncpa [#allocation3], 1
    %329 = vsyncpa [#allocation6], 1
    %330 = vsyncpa [#allocation4], 1

</llo_original>
